<compile_context>
chip_gen: v7x
topology: tpu7x:2x2x1
jax: 0.10.0
libtpu: 0.0.40
codegen_flags: <defaults>
</compile_context>

<pallas_src>
import math

import jax
import jax.numpy as jnp
from jax import lax
from jax.experimental import pallas as pl
from jax.experimental.pallas import tpu as pltpu


def _round_up(v, m):
    return ((v + m - 1) // m) * m


# ---------------------------------------------------------------------------
# Kernel 1: fused phi/g 1x1-conv projections (one wide matmul per row tile).
# ---------------------------------------------------------------------------
def _proj_kernel(x_ref, w_ref, b_ref, o_ref):
    # x_ref: (TQ, Cp) compute dtype; w_ref: (Cp, 2*Cip) compute dtype;
    # b_ref: (1, 2*Cip) f32.
    p = jnp.dot(x_ref[...], w_ref[...], preferred_element_type=jnp.float32)
    o_ref[...] = (p + b_ref[...]).astype(o_ref.dtype)


# ---------------------------------------------------------------------------
# Kernel 2: flash-style attention (online softmax) + conv_mask + residual.
# theta is computed in-kernel from the resident x tile (once per q tile).
# ---------------------------------------------------------------------------
def _make_attn_kernel(cip, tk, hw, hw_pad, exp_dtype, approx_reciprocal):
    need_key_mask = hw_pad > hw

    def kernel(xq_ref, pg_ref, wth_ref, bth_ref, wm_ref, bm_ref, o_ref,
               th_sc, m_sc, l_sc, acc_sc):
        ki = pl.program_id(2)

        @pl.when(ki == 0)
        def _():
            # theta = x_tile @ W_theta + b_theta, amortized over all k steps.
            th = jnp.dot(xq_ref[...].astype(wth_ref.dtype), wth_ref[...],
                         preferred_element_type=jnp.float32) + bth_ref[...]
            th_sc[...] = th.astype(th_sc.dtype)
            m_sc[...] = jnp.full_like(m_sc, -jnp.inf)
            l_sc[...] = jnp.zeros_like(l_sc)
            acc_sc[...] = jnp.zeros_like(acc_sc)

        pg = pg_ref[...]                         # (TK, 2*Cip) compute dtype
        phi = pg[:, :cip]                        # lane-aligned slices
        g = pg[:, cip:]

        # theta @ phi^T without an explicit transpose: contract dim 1 of both.
        s = lax.dot_general(th_sc[...], phi, (((1,), (1,)), ((), ())),
                            preferred_element_type=jnp.float32)  # (TQ, TK)
        if need_key_mask:
            key_idx = ki * tk + lax.broadcasted_iota(jnp.int32, (1, tk), 1)
            s = jnp.where(key_idx < hw, s, jnp.float32(-1e30))

        m_prev = m_sc[...]
        m_new = jnp.maximum(m_prev, jnp.max(s, axis=-1, keepdims=True))
        alpha = jnp.exp(m_prev - m_new)                     # f32
        p = jnp.exp((s - m_new).astype(exp_dtype))          # bf16 exp on v6e/v7x
        l_sc[...] = alpha * l_sc[...] + jnp.sum(
            p, axis=-1, keepdims=True, dtype=jnp.float32)   # denom stays f32
        acc_sc[...] = alpha * acc_sc[...] + jnp.dot(
            p.astype(g.dtype), g, preferred_element_type=jnp.float32)
        m_sc[...] = m_new

        @pl.when(ki == pl.num_programs(2) - 1)
        def _():
            # Scale y (TQ x Cip) instead of the full (TQ x TK) attention tile.
            if approx_reciprocal:
                inv_l = pl.reciprocal(l_sc[...], approx=True)
            else:
                inv_l = 1.0 / l_sc[...]
            y = acc_sc[...] * inv_l
            mask = jnp.dot(y.astype(wm_ref.dtype), wm_ref[...],
                           preferred_element_type=jnp.float32) + bm_ref[...]
            o_ref[...] = (mask + xq_ref[...].astype(jnp.float32)
                          ).astype(o_ref.dtype)

    return kernel


def _maybe_buffered_spec(block_shape, index_map, nbuf):
    """phi/g stream spec; triple-buffer if the API supports pipeline_mode."""
    if nbuf and nbuf > 2:
        try:
            return pl.BlockSpec(block_shape, index_map,
                                pipeline_mode=pl.Buffered(nbuf))
        except Exception:  # pragma: no cover - older API, fall back cleanly
            pass
    return pl.BlockSpec(block_shape, index_map)


# ---------------------------------------------------------------------------
# Wrapper
# ---------------------------------------------------------------------------
def nonlocal_block_2d(x_nchw, params, *, tq=None, tk=None,
                      compute_dtype=jnp.bfloat16, exp_dtype=None,
                      approx_reciprocal=True, kv_buffers=3,
                      vmem_budget_bytes=32 * 1024 * 1024):
    """NonLocalBlock2D forward. x_nchw: (B, C, H, W) float32."""
    B, C, H, W = x_nchw.shape
    HW = H * W
    Ci = params["wg"].shape[1]

    f32 = jnp.float32
    Cp = _round_up(C, 128)        # lane-dense channel dims
    Cip = _round_up(Ci, 128)
    exp_dtype = compute_dtype if exp_dtype is None else exp_dtype
    csize = jnp.dtype(compute_dtype).itemsize

    # --- tile selection: large tq (arithmetic intensity), moderate tk -------
    if tq is None:
        tq = min(512, pl.next_power_of_2(HW))
    if tk is None:
        tk = min(256, pl.next_power_of_2(HW))

    def attn_vmem(tq_, tk_):
        # Resident footprint of kernel 2 (double-buffered pipelined inputs).
        return (2 * tq_ * Cp * csize                 # x tile
                + 2 * tq_ * Cp * 4                   # out tile (f32)
                + max(2, kv_buffers) * tk_ * 2 * Cip * csize   # phi|g stream
                + 2 * Cp * Cip * csize               # W_theta
                + 2 * Cip * Cp * csize               # W_mask
                + tq_ * Cip * (csize + 4)            # theta scratch + f32 acc
                + 2 * tq_ * 4                        # m, l
                + 4 * (Cip + Cp) * 4)                # biases + slack

    # Explicit VMEM budget check (v7x: 64 MiB physical, 32 MiB scoped default).
    while attn_vmem(tq, tk) > vmem_budget_bytes and (tq > 128 or tk > 128):
        if tq >= tk and tq > 128:
            tq //= 2
        elif tk > 128:
            tk //= 2
        else:
            break

    HWp = _round_up(HW, math.lcm(tq, tk))   # pad HW; padded keys are masked
    nq, nk = HWp // tq, HWp // tk
    vmem_limit = int(min(48 << 20, max(32 << 20, 2 * attn_vmem(tq, tk))))

    # --- host-side layout prep ----------------------------------------------
    def pad2(a, r, c):
        return jnp.pad(a.astype(f32), ((0, r - a.shape[0]), (0, c - a.shape[1])))

    # NCHW -> (B, HWp, Cp), pre-cast to the compute dtype (halves the x stream).
    x = jnp.transpose(x_nchw.astype(f32), (0, 2, 3, 1)).reshape(B, HW, C)
    x = jnp.pad(x, ((0, 0), (0, HWp - HW), (0, Cp - C))).astype(compute_dtype)

    # Fused [phi | g] weights: one contiguous k-stream block for kernel 2.
    w_pg = jnp.concatenate([pad2(params["wp"], Cp, Cip),
                            pad2(params["wg"], Cp, Cip)],
                           axis=1).astype(compute_dtype)
    b_pg = jnp.concatenate([pad2(params["bp"], 1, Cip),
                            pad2(params["bg"], 1, Cip)], axis=1)       # f32
    w_th = pad2(params["wt"], Cp, Cip).astype(compute_dtype)
    b_th = pad2(params["bt"], 1, Cip)                                   # f32
    w_m = pad2(params["wm"], Cip, Cp).astype(compute_dtype)
    b_m = pad2(params["bm"], 1, Cp)                                     # f32

    # --- Kernel 1: [phi | g] projections -------------------------------------
    proj_cost = pl.CostEstimate(
        flops=int(2 * B * HWp * Cp * 2 * Cip),
        transcendentals=0,
        bytes_accessed=int(B * HWp * Cp * csize + Cp * 2 * Cip * csize
                           + B * HWp * 2 * Cip * csize))
    proj = pl.pallas_call(
        _proj_kernel,
        out_shape=jax.ShapeDtypeStruct((B, HWp, 2 * Cip), compute_dtype),
        grid_spec=pltpu.PrefetchScalarGridSpec(
            num_scalar_prefetch=0,
            grid=(B, nq),
            in_specs=[
                pl.BlockSpec((None, tq, Cp), lambda b, i: (b, i, 0)),     # x
                pl.BlockSpec((Cp, 2 * Cip), lambda b, i: (0, 0)),         # [Wp|Wg]
                pl.BlockSpec((1, 2 * Cip), lambda b, i: (0, 0)),          # bias
            ],
            out_specs=pl.BlockSpec((None, tq, 2 * Cip), lambda b, i: (b, i, 0)),
        ),
        compiler_params=pltpu.CompilerParams(
            dimension_semantics=("parallel", "parallel"),
            vmem_limit_bytes=vmem_limit),
        cost_estimate=proj_cost,
    )(x, w_pg, b_pg)

    # --- Kernel 2: flash attention + theta + conv_mask + residual ------------
    attn_kernel = _make_attn_kernel(Cip, tk, HW, HWp, exp_dtype,
                                    approx_reciprocal)
    attn_cost = pl.CostEstimate(
        flops=int(B * (4 * HWp * HWp * Cip + 4 * HWp * Cp * Cip)),
        transcendentals=int(B * HWp * HWp),
        bytes_accessed=int(B * HWp * Cp * csize
                           + B * nq * HWp * 2 * Cip * csize
                           + B * HWp * Cp * 4))
    out = pl.pallas_call(
        attn_kernel,
        out_shape=jax.ShapeDtypeStruct((B, HWp, Cp), jnp.float32),
        grid_spec=pltpu.PrefetchScalarGridSpec(
            num_scalar_prefetch=0,
            grid=(B, nq, nk),
            in_specs=[
                pl.BlockSpec((None, tq, Cp), lambda b, qi, ki: (b, qi, 0)),     # x
                _maybe_buffered_spec((None, tk, 2 * Cip),
                                     lambda b, qi, ki: (b, ki, 0),
                                     kv_buffers),                               # [phi|g]
                pl.BlockSpec((Cp, Cip), lambda b, qi, ki: (0, 0)),              # W_theta
                pl.BlockSpec((1, Cip), lambda b, qi, ki: (0, 0)),               # b_theta
                pl.BlockSpec((Cip, Cp), lambda b, qi, ki: (0, 0)),              # W_mask
                pl.BlockSpec((1, Cp), lambda b, qi, ki: (0, 0)),                # b_mask
            ],
            out_specs=pl.BlockSpec((None, tq, Cp), lambda b, qi, ki: (b, qi, 0)),
            scratch_shapes=[
                pltpu.VMEM((tq, Cip), compute_dtype),   # theta (per q tile)
                pltpu.VMEM((tq, 1), jnp.float32),       # running max m
                pltpu.VMEM((tq, 1), jnp.float32),       # running denom l
                pltpu.VMEM((tq, Cip), jnp.float32),     # running numerator
            ],
        ),
        compiler_params=pltpu.CompilerParams(
            dimension_semantics=("parallel", "parallel", "arbitrary"),
            vmem_limit_bytes=vmem_limit),
        cost_estimate=attn_cost,
    )(x, proj, w_th, b_th, w_m, b_m)

    # (B, HWp, Cp) -> NCHW, drop spatial + channel padding.
    out = out[:, :HW, :C].reshape(B, H, W, C)
    return jnp.transpose(out, (0, 3, 1, 2))


# ---------------------------------------------------------------------------
# Parameters / reference
# ---------------------------------------------------------------------------
def make_params(key, in_channels, reduction=2):
    """Deterministic synthetic 1x1-conv params (conv_block = Conv2d + bias).

    PyTorch Conv2d weight (out, in, 1, 1) applied on NCHW equals
    x_{hw,c} @ W^T + b in channels-last layout, so weights are stored (in, out)."""
    ci = in_channels // reduction
    keys = jax.random.split(key, 8)
    scale = 0.1
    return {
        "wg": scale * jax.random.normal(keys[0], (in_channels, ci), jnp.float32),
        "bg": scale * jax.random.normal(keys[1], (1, ci), jnp.float32),
        "wt": scale * jax.random.normal(keys[2], (in_channels, ci), jnp.float32),
        "bt": scale * jax.random.normal(keys[3], (1, ci), jnp.float32),
        "wp": scale * jax.random.normal(keys[4], (in_channels, ci), jnp.float32),
        "bp": scale * jax.random.normal(keys[5], (1, ci), jnp.float32),
        "wm": scale * jax.random.normal(keys[6], (ci, in_channels), jnp.float32),
        "bm": scale * jax.random.normal(keys[7], (1, in_channels), jnp.float32),
    }


def reference_nonlocal(x_nchw, params):
    """Plain-JAX reference mirroring the PyTorch forward."""
    B, C, H, W = x_nchw.shape
    x = jnp.transpose(x_nchw, (0, 2, 3, 1)).reshape(B, H * W, C)
    g = x @ params["wg"] + params["bg"]
    th = x @ params["wt"] + params["bt"]
    ph = x @ params["wp"] + params["bp"]
    s = jnp.einsum("bqc,bkc->bqk", th, ph)
    a = jax.nn.softmax(s, axis=-1)
    y = jnp.einsum("bqk,bkc->bqc", a, g)
    out = y @ params["wm"] + params["bm"] + x
    return jnp.transpose(out.reshape(B, H, W, C), (0, 3, 1, 2))


if __name__ == "__main__":
    key = jax.random.PRNGKey(0)
    k_x, k_p, k_x2 = jax.random.split(key, 3)

    B, C, H, W = 2, 4, 16, 16
    x = jax.random.normal(k_x, (B, C, H, W), jnp.float32)
    params = make_params(k_p, in_channels=C, reduction=2)
    ref = reference_nonlocal(x, params)

    # 1) f32 path with small tiles -> multi-step online softmax is exercised.
    out_f32 = nonlocal_block_2d(x, params, tq=64, tk=64,
                                compute_dtype=jnp.float32)
    out_f32 = jax.block_until_ready(out_f32)
    assert out_f32.shape == (B, C, H, W)
    assert jnp.allclose(out_f32, ref, atol=1e-2, rtol=1e-2)

    # 2) Default fast path: bf16 MXU operands, bf16 softmax exp, large tiles.
    out_bf16 = nonlocal_block_2d(x, params)
    out_bf16 = jax.block_until_ready(out_bf16)
    assert out_bf16.shape == (B, C, H, W)
    assert jnp.allclose(out_bf16, ref, atol=8e-2, rtol=8e-2)

    # 3) Non-tile-multiple spatial size -> padded + masked key path.
    B2, H2, W2 = 1, 10, 10
    x2 = jax.random.normal(k_x2, (B2, C, H2, W2), jnp.float32)
    ref2 = reference_nonlocal(x2, params)
    out2 = nonlocal_block_2d(x2, params, compute_dtype=jnp.float32)
    out2 = jax.block_until_ready(out2)
    assert out2.shape == (B2, C, H2, W2)
    assert jnp.allclose(out2, ref2, atol=1e-2, rtol=1e-2)

    print("KERNEL_OK")
</pallas_src>

<mosaic_0001>
module attributes {stable_mosaic.version = 11 : i64} {
  func.func @_proj_kernel(%arg0: i32, %arg1: i32, %arg2: memref<1x64x128xf32, #tpu.memory_space<vmem>>, %arg3: memref<128x256xf32, #tpu.memory_space<vmem>>, %arg4: memref<1x256xf32, #tpu.memory_space<vmem>>, %arg5: memref<1x64x256xf32, #tpu.memory_space<vmem>>) attributes {dimension_semantics = [#tpu.dimension_semantics<parallel>, #tpu.dimension_semantics<parallel>], iteration_bounds = array<i64: 2, 4>, scalar_prefetch = 0 : i64, scratch_operands = 0 : i64, tpu.core_type = #tpu.core_type<tc>, window_params = [{transform_indices = @transform_0, window_bounds = array<i64: 1, 64, 128>}, {pipeline_mode = #tpu.pipeline_mode<synchronous>, transform_indices = @transform_1, window_bounds = array<i64: 128, 256>}, {pipeline_mode = #tpu.pipeline_mode<synchronous>, transform_indices = @transform_2, window_bounds = array<i64: 1, 256>}, {transform_indices = @transform_3, window_bounds = array<i64: 1, 64, 256>}]} {
    %c0 = arith.constant 0 : index
    %c0_0 = arith.constant 0 : index
    %c0_1 = arith.constant 0 : index
    %0 = vector.load %arg2[%c0, %c0_0, %c0_1] : memref<1x64x128xf32, #tpu.memory_space<vmem>>, vector<1x64x128xf32>
    %1 = vector.shape_cast %0 : vector<1x64x128xf32> to vector<64x128xf32>
    %c0_2 = arith.constant 0 : index
    %c0_3 = arith.constant 0 : index
    %2 = vector.load %arg3[%c0_2, %c0_3] : memref<128x256xf32, #tpu.memory_space<vmem>>, vector<128x256xf32>
    %cst = arith.constant dense<0.000000e+00> : vector<64x256xf32>
    %3 = tpu.matmul %1, %2, %cst {dimension_numbers = #tpu.dot_dimension_numbers<[1], [0], [0], [1], [0, 0, 1, 1], [], []>} : vector<64x128xf32>, vector<128x256xf32>, vector<64x256xf32> -> vector<64x256xf32>
    %c0_4 = arith.constant 0 : index
    %c0_5 = arith.constant 0 : index
    %4 = vector.load %arg4[%c0_4, %c0_5] : memref<1x256xf32, #tpu.memory_space<vmem>>, vector<1x256xf32>
    %5 = vector.broadcast %4 : vector<1x256xf32> to vector<64x256xf32>
    %6 = arith.addf %3, %5 : vector<64x256xf32>
    %c0_6 = arith.constant 0 : index
    %c0_7 = arith.constant 0 : index
    %c0_8 = arith.constant 0 : index
    %7 = vector.load %arg5[%c0_6, %c0_7, %c0_8] : memref<1x64x256xf32, #tpu.memory_space<vmem>>, vector<1x64x256xf32>
    %8 = vector.shape_cast %7 : vector<1x64x256xf32> to vector<64x256xf32>
    %9 = vector.shape_cast %6 : vector<64x256xf32> to vector<1x64x256xf32>
    tpu.vector_store %arg5[%c0_6, %c0_7, %c0_8], %9 {strides = array<i32>} : memref<1x64x256xf32, #tpu.memory_space<vmem>>, vector<1x64x256xf32>,
    return
  }
  func.func @transform_0(%arg0: i32, %arg1: i32) -> (i32, i32, i32) {
    %c0_i32 = arith.constant 0 : i32
    %c0_i32_0 = arith.constant 0 : i32
    return %arg0, %arg1, %c0_i32 : i32, i32, i32
  }
  func.func @transform_1(%arg0: i32, %arg1: i32) -> (i32, i32) {
    %c0_i32 = arith.constant 0 : i32
    %c0_i32_0 = arith.constant 0 : i32
    %c0_i32_1 = arith.constant 0 : i32
    return %c0_i32, %c0_i32_0 : i32, i32
  }
  func.func @transform_2(%arg0: i32, %arg1: i32) -> (i32, i32) {
    %c0_i32 = arith.constant 0 : i32
    %c0_i32_0 = arith.constant 0 : i32
    %c0_i32_1 = arith.constant 0 : i32
    return %c0_i32, %c0_i32_0 : i32, i32
  }
  func.func @transform_3(%arg0: i32, %arg1: i32) -> (i32, i32, i32) {
    %c0_i32 = arith.constant 0 : i32
    %c0_i32_0 = arith.constant 0 : i32
    return %arg0, %arg1, %c0_i32 : i32, i32, i32
  }
}

</mosaic_0001>

<llo_original>
// kernel: tpu_custom_call.1
$region0: #{tpu_custom_call.1}
  #allocation0 [shape = 'u32[]', space=smem, size = 0x4, offset = 0x4, fixed_abs, tag = 'smem constant byte address 0x4 - core index']
  #allocation1 [shape = 'u32[144,128]{1,0:T(1,128)}', space=vmem, size = 0x12000, scoped, tag = 'internal scratch']
  %s0 = inlined_call_operand.hbm [shape: f32[2,256,128], index: 0, kind: input, shape index: {}]
  %s1 = inlined_call_operand.hbm [shape: f32[128,256], index: 1, kind: input, shape index: {}]
  %s2 = inlined_call_operand.vmem [shape: f32[1,256], index: 2, kind: input, shape index: {}]
  %s3 = inlined_call_operand.hbm [shape: f32[2,256,256], index: 3, kind: output, shape index: {}]
  %s4 = sld [smem:[#allocation0]]
  $region53: #{tpu_custom_call.1} parent=0
    _
  %s6 = ssub.s32 1, %s4
  %s7 = scalar_select 0, %s6, %s4
  $region1: #{tpu_custom_call.1} parent=0
    #allocation2 [shape = 'u8[65536]{0}', space=vmem, size = 0x10000, scoped, tag = 'input window, operand 0']
    #allocation3 [shape = 's32[2]{0}', space=sflag, size = 0x8, scoped, tag = 'scoped memory for tpu_custom_call.1']
    #allocation4 [shape = 's32[2]{0}', space=sflag, size = 0x8, scoped, tag = 'scoped memory for tpu_custom_call.1']
    #allocation5 [shape = 'u8[131072]{0}', space=vmem, size = 0x20000, scoped, tag = 'input window, operand 1, single buffered']
    #allocation6 [shape = 's32[1]{0}', space=sflag, size = 0x4, scoped, tag = 'scoped memory for tpu_custom_call.1']
    #allocation7 [shape = 'u8[131072]{0}', space=vmem, size = 0x20000, scoped, tag = 'output window, operand 0']
    %8 = vsyncpa [#allocation3], 0
    %s9 = scalar_lea.sflag [#allocation3], 1
    %10 = vsyncpa %s9, 0
    %11 = vsyncpa [#allocation6], 0
    %12 = vsyncpa [#allocation4], 0
    %s13 = scalar_lea.sflag [#allocation4], 1
    %14 = vsyncpa %s13, 0
    loop: start=0, step=1, limit=10
    $region2: #{tpu_custom_call.1} parent=1 // loop_pre_header
      _
    $region3: #{tpu_custom_call.1} parent=1 // loop_header
      %s16 = sphi 0, %s20
      %p17 = scmp.ge.s32.totalorder %s16, 10
      %s23 = sphi 0, %s35
      %s24 = sphi 0, %s31
      %s25 = sphi 0, %s23
      %s26 = sphi 0, %s24
      %s27 = sphi 0, %s25
      %s28 = sphi 0, %s26
      %s40 = sphi 0, %s42
      %s43 = sphi 0, %s40
      %s44 = sphi 0, %s43
      %s60 = sphi 0, %s44
      %s64 = sphi 0, %s64
      %s66 = sphi 0, %s64
      %s67 = sphi 0, %s66
      %s81 = sphi 0, %s67
      %s85 = sphi 0, %s85
      %s87 = sphi 0, %s85
      %s88 = sphi 0, %s87
      %s102 = sphi 0, %s88
      %s110 = sphi 0, %s112
      %s113 = sphi 0, %s110
      %s114 = sphi 0, %s113
      %s130 = sphi 0, %s114
    $region4: #{tpu_custom_call.1} parent=1 // loop_header_branch
      %19 = sbr.rel (%p17) target = $region8
    $region5: #{tpu_custom_call.1} parent=1 // loop_body
      %s21 = ssub.s32 %s16, 1
      %s22 = ssub.s32 %s16, 2
      %s29 = sadd.s32 1, %s24
      %p30 = scmp.ge.s32.totalorder %s29, 4
      %s31 = scalar_select %p30, 0, %s29
      %s32 = sadd.s32 1, %s23
      %s33 = scalar_select %p30, %s32, %s23
      %p34 = scmp.ge.s32.totalorder %s33, 2
      %s35 = scalar_select %p34, 0, %s33
      %s36 = ssub.s32 %s23, %s35
      %s37 = ssub.s32 %s24, %s31
      %s38 = sor.u32 %s36, %s37
      %p39 = scmp.eq.s32.totalorder %s38, 0
      %s41 = sadd.s32 %s40, 1
      %s42 = scalar_select %p39, %s40, %s41
      %p45 = pneg %p39
      %p46 = scmp.eq.s32.totalorder %s16, 7
      %p47 = por %p45, %p46
      %p48 = scmp.ne.s32.totalorder %s40, %s43
      %p49 = scmp.eq.s32.totalorder %s16, 0
      %p50 = por %p48, %p49
      %p51 = scmp.ne.s32.totalorder %s40, %s43
      %p52 = scmp.eq.s32.totalorder %s21, 7
      %p53 = por %p51, %p52
      %p54 = scmp.ne.s32.totalorder %s43, %s44
      %p55 = scmp.eq.s32.totalorder %s21, 0
      %p56 = por %p54, %p55
      %p57 = scmp.ne.s32.totalorder %s43, %s44
      %p58 = scmp.eq.s32.totalorder %s22, 7
      %p59 = por %p57, %p58
      %p61 = scmp.ne.s32.totalorder %s44, %s60
      %p62 = scmp.eq.s32.totalorder %s22, 0
      %p63 = por %p61, %p62
      %s65 = sadd.s32 %s64, 1
      %p68 = scmp.eq.s32.totalorder %s16, 7
      %p69 = scmp.ne.s32.totalorder %s64, %s66
      %p70 = scmp.eq.s32.totalorder %s16, 0
      %p71 = por %p69, %p70
      %p72 = scmp.ne.s32.totalorder %s64, %s66
      %p73 = scmp.eq.s32.totalorder %s21, 7
      %p74 = por %p72, %p73
      %p75 = scmp.ne.s32.totalorder %s66, %s67
      %p76 = scmp.eq.s32.totalorder %s21, 0
      %p77 = por %p75, %p76
      %p78 = scmp.ne.s32.totalorder %s66, %s67
      %p79 = scmp.eq.s32.totalorder %s22, 7
      %p80 = por %p78, %p79
      %p82 = scmp.ne.s32.totalorder %s67, %s81
      %p83 = scmp.eq.s32.totalorder %s22, 0
      %p84 = por %p82, %p83
      %s86 = sadd.s32 %s85, 1
      %p89 = scmp.eq.s32.totalorder %s16, 7
      %p90 = scmp.ne.s32.totalorder %s85, %s87
      %p91 = scmp.eq.s32.totalorder %s16, 0
      %p92 = por %p90, %p91
      %p93 = scmp.ne.s32.totalorder %s85, %s87
      %p94 = scmp.eq.s32.totalorder %s21, 7
      %p95 = por %p93, %p94
      %p96 = scmp.ne.s32.totalorder %s87, %s88
      %p97 = scmp.eq.s32.totalorder %s21, 0
      %p98 = por %p96, %p97
      %p99 = scmp.ne.s32.totalorder %s87, %s88
      %p100 = scmp.eq.s32.totalorder %s22, 7
      %p101 = por %p99, %p100
      %p103 = scmp.ne.s32.totalorder %s88, %s102
      %p104 = scmp.eq.s32.totalorder %s22, 0
      %p105 = por %p103, %p104
      %s106 = ssub.s32 %s23, %s35
      %s107 = ssub.s32 %s24, %s31
      %s108 = sor.u32 %s106, %s107
      %p109 = scmp.eq.s32.totalorder %s108, 0
      %s111 = sadd.s32 %s110, 1
      %s112 = scalar_select %p109, %s110, %s111
      %p115 = pneg %p109
      %p116 = scmp.eq.s32.totalorder %s16, 7
      %p117 = por %p115, %p116
      %p118 = scmp.ne.s32.totalorder %s110, %s113
      %p119 = scmp.eq.s32.totalorder %s16, 0
      %p120 = por %p118, %p119
      %p121 = scmp.ne.s32.totalorder %s110, %s113
      %p122 = scmp.eq.s32.totalorder %s21, 7
      %p123 = por %p121, %p122
      %p124 = scmp.ne.s32.totalorder %s113, %s114
      %p125 = scmp.eq.s32.totalorder %s21, 0
      %p126 = por %p124, %p125
      %p127 = scmp.ne.s32.totalorder %s113, %s114
      %p128 = scmp.eq.s32.totalorder %s22, 7
      %p129 = por %p127, %p128
      %p131 = scmp.ne.s32.totalorder %s114, %s130
      %p132 = scmp.eq.s32.totalorder %s22, 0
      %p133 = por %p131, %p132
      %p134 = scmp.le.s32.totalorder 1, %s16
      %p135 = scmp.lt.s32.totalorder %s16, 9
      %p136 = pnand %p134, %p135
      %p137 = pneg %p136
      // Predicated region
      $region9: #{tpu_custom_call.1} parent=5 // pred_check
        _
      $region10: #{tpu_custom_call.1} parent=5 // pred_check_branch
        %139 = sbr.rel (%p136) target = $region12
      $region11: #{tpu_custom_call.1} parent=5 // pred_region
        %s140 = ssub.s32 %s16, 1
        // Predicated region
        $region13: #{tpu_custom_call.1} parent=11 // pred_check
          %p141 = pneg %p77
        $region14: #{tpu_custom_call.1} parent=11 // pred_check_branch
          %143 = sbr.rel (%p141) target = $region16
        $region15: #{tpu_custom_call.1} parent=11 // pred_region
          %s145 = ssub.s32 4096, 4096
          %146 = vsyncadd [#allocation6], %s145
          %s147 = sshll.u32 [#allocation5], 4
          %s148 = int_to_ptr.vmem [resolvable:$true] %s147
          %153 = dma.hbm_to_vmem [thread:$0]  %s1, 4096, %s148, [#allocation6], 256, 256, 16
        $region16: #{tpu_custom_call.1} parent=11 // pred_fallthru
          _
        // Predicated region
        $region17: #{tpu_custom_call.1} parent=11 // pred_check
          %p154 = pneg %p98
        $region18: #{tpu_custom_call.1} parent=11 // pred_check_branch
          %156 = sbr.rel (%p154) target = $region20
        $region19: #{tpu_custom_call.1} parent=11 // pred_region
          _
        $region20: #{tpu_custom_call.1} parent=11 // pred_fallthru
          _
      $region12: #{tpu_custom_call.1} parent=5 // pred_fallthru
        _
      %p157 = scmp.lt.s32.totalorder %s16, 8
      // Predicated region
      $region21: #{tpu_custom_call.1} parent=5 // pred_check
        %p158 = pneg %p157
      $region22: #{tpu_custom_call.1} parent=5 // pred_check_branch
        %160 = sbr.rel (%p158) target = $region24
      $region23: #{tpu_custom_call.1} parent=5 // pred_region
        // Predicated region
        $region25: #{tpu_custom_call.1} parent=23 // pred_check
          %p161 = pneg %p50
        $region26: #{tpu_custom_call.1} parent=23 // pred_check_branch
          %163 = sbr.rel (%p161) target = $region28
        $region27: #{tpu_custom_call.1} parent=23 // pred_region
          %s164 = sand.u32 %s40, 1
          %s165 = scalar_lea.sflag [#allocation3], %s164
          %s166 = sand.u32 %s40, 1
          %s167 = smul.addr %s166, 64
          %s168 = scalar_lea.vmem [#allocation2], %s167
          %s169 = smul.u32 8, %s24
          %s171 = ssub.s32 1024, 1024
          %172 = vsyncadd %s165, %s171
          %s173 = smul.addr %s23, 32
          %s174 = sadd.s32 %s169, %s173
          %s175 = smul.addr %s174, 128
          %s176 = scalar_lea.hbm %s0, %s175
          %s177 = sshll.u32 %s168, 4
          %s178 = int_to_ptr.vmem [resolvable:$true] %s177
          %183 = dma.hbm_to_vmem [thread:$0]  %s176, 1024, %s178, %s165, 128, 128, 8
        $region28: #{tpu_custom_call.1} parent=23 // pred_fallthru
          _
      $region24: #{tpu_custom_call.1} parent=5 // pred_fallthru
        _
      %p184 = scmp.le.s32.totalorder 1, %s16
      %p185 = scmp.lt.s32.totalorder %s16, 9
      %p186 = pnand %p184, %p185
      %p187 = pneg %p186
      // Predicated region
      $region29: #{tpu_custom_call.1} parent=5 // pred_check
        _
      $region30: #{tpu_custom_call.1} parent=5 // pred_check_branch
        %189 = sbr.rel (%p186) target = $region32
      $region31: #{tpu_custom_call.1} parent=5 // pred_region
        %s190 = ssub.s32 %s16, 1
        %s191 = sand.u32 %s43, 1
        %s192 = scalar_lea.sflag [#allocation3], %s191
        %s193 = sand.u32 %s43, 1
        %s194 = smul.addr %s193, 64
        %s195 = scalar_lea.vmem [#allocation2], %s194
        // Predicated region
        $region33: #{tpu_custom_call.1} parent=31 // pred_check
          %p196 = pneg %p56
        $region34: #{tpu_custom_call.1} parent=31 // pred_check_branch
          %198 = sbr.rel (%p196) target = $region36
        $region35: #{tpu_custom_call.1} parent=31 // pred_region
          %199 = dma.done %s192, 1024
        $region36: #{tpu_custom_call.1} parent=31 // pred_fallthru
          _
        // Predicated region
        $region37: #{tpu_custom_call.1} parent=31 // pred_check
          %p200 = pneg %p77
        $region38: #{tpu_custom_call.1} parent=31 // pred_check_branch
          %202 = sbr.rel (%p200) target = $region40
        $region39: #{tpu_custom_call.1} parent=31 // pred_region
          %203 = dma.done [#allocation6], 4096
        $region40: #{tpu_custom_call.1} parent=31 // pred_fallthru
          _
        %s204 = sand.u32 %s43, 1
        %s205 = scalar_lea.sflag [#allocation3], %s204
        %s206 = sand.u32 %s43, 1
        %s207 = smul.addr %s206, 64
        %s208 = scalar_lea.vmem [#allocation2], %s207
        %p209 = pneg %p56
        %p210 = pneg %p53
        %p211 = pneg %p77
        %p212 = pneg %p74
        %p213 = pneg %p98
        %p214 = pneg %p95
        %p215 = pneg %p126
        %p216 = pneg %p123
        %s217 = sand.u32 %s113, 1
        %s218 = scalar_lea.sflag [#allocation4], %s217
        %s219 = sand.u32 %s113, 1
        %s220 = smul.addr %s219, 128
        %s221 = scalar_lea.vmem [#allocation7], %s220
        %s222 = smul.u32 8, %s26
        %s223 = smul.u32 8, %s26
        %v224 = vld [vmem:[%s195] sm:$0xff]
        %v225 = vld [vmem:[%s195 + $0x8] sm:$0xff]
        %v226 = vld [vmem:[%s195 + $0x10] sm:$0xff]
        %v227 = vld [vmem:[%s195 + $0x18] sm:$0xff]
        %v228 = vld [vmem:[%s195 + $0x20] sm:$0xff]
        %v229 = vld [vmem:[%s195 + $0x28] sm:$0xff]
        %v230 = vld [vmem:[%s195 + $0x30] sm:$0xff]
        %v231 = vld [vmem:[%s195 + $0x38] sm:$0xff]
        %v232 = vld [vmem:[#allocation5] sm:$0xff]
        %v233 = vld [vmem:[#allocation5 + $0x8] sm:$0xff]
        %v234 = vld [vmem:[#allocation5 + $0x10] sm:$0xff]
        %v235 = vld [vmem:[#allocation5 + $0x18] sm:$0xff]
        %v236 = vld [vmem:[#allocation5 + $0x20] sm:$0xff]
        %v237 = vld [vmem:[#allocation5 + $0x28] sm:$0xff]
        %v238 = vld [vmem:[#allocation5 + $0x30] sm:$0xff]
        %v239 = vld [vmem:[#allocation5 + $0x38] sm:$0xff]
        %v240 = vld [vmem:[#allocation5 + $0x40] sm:$0xff]
        %v241 = vld [vmem:[#allocation5 + $0x48] sm:$0xff]
        %v242 = vld [vmem:[#allocation5 + $0x50] sm:$0xff]
        %v243 = vld [vmem:[#allocation5 + $0x58] sm:$0xff]
        %v244 = vld [vmem:[#allocation5 + $0x60] sm:$0xff]
        %v245 = vld [vmem:[#allocation5 + $0x68] sm:$0xff]
        %v246 = vld [vmem:[#allocation5 + $0x70] sm:$0xff]
        %v247 = vld [vmem:[#allocation5 + $0x78] sm:$0xff]
        %v248 = vld [vmem:[#allocation5 + $0x80] sm:$0xff]
        %v249 = vld [vmem:[#allocation5 + $0x88] sm:$0xff]
        %v250 = vld [vmem:[#allocation5 + $0x90] sm:$0xff]
        %v251 = vld [vmem:[#allocation5 + $0x98] sm:$0xff]
        %v252 = vld [vmem:[#allocation5 + $0xa0] sm:$0xff]
        %v253 = vld [vmem:[#allocation5 + $0xa8] sm:$0xff]
        %v254 = vld [vmem:[#allocation5 + $0xb0] sm:$0xff]
        %v255 = vld [vmem:[#allocation5 + $0xb8] sm:$0xff]
        %v256 = vld [vmem:[#allocation5 + $0xc0] sm:$0xff]
        %v257 = vld [vmem:[#allocation5 + $0xc8] sm:$0xff]
        %v258 = vld [vmem:[#allocation5 + $0xd0] sm:$0xff]
        %v259 = vld [vmem:[#allocation5 + $0xd8] sm:$0xff]
        %v260 = vld [vmem:[#allocation5 + $0xe0] sm:$0xff]
        %v261 = vld [vmem:[#allocation5 + $0xe8] sm:$0xff]
        %v262 = vld [vmem:[#allocation5 + $0xf0] sm:$0xff]
        %v263 = vld [vmem:[#allocation5 + $0xf8] sm:$0xff]
        %v264 = vld [vmem:[%s2] sm:$0x3]
        %v266 = vlaneseq
        %v267 = vshrl.u32 %v266, 7
        %v268 = vsub.s32 0, %v267
        %v269 = vrot.slane %v264, %v268
        %v270 = vlaneseq
        %v271 = vshrl.u32 %v270, 7
        %v272 = vsub.s32 1, %v271
        %v273 = vrot.slane %v264, %v272
        %276 = vmatprep.subr.mxu0 %v233
        %277 = vmatpush1.msra.mxu0 %v232
        %278 = vmatprep.subr.mxu0 %v235
        %279 = vmatpush1.msra.mxu0 %v234
        %280 = vmatprep.subr.mxu0 %v237
        %281 = vmatpush1.msra.mxu0 %v236
        %282 = vmatprep.subr.mxu0 %v239
        %283 = vmatpush1.msra.mxu0 %v238
        %284 = vmatprep.subr.mxu0 %v241
        %285 = vmatpush1.msra.mxu0 %v240
        %286 = vmatprep.subr.mxu0 %v243
        %287 = vmatpush1.msra.mxu0 %v242
        %288 = vmatprep.subr.mxu0 %v245
        %289 = vmatpush1.msra.mxu0 %v244
        %290 = vmatprep.subr.mxu0 %v247
        %291 = vmatpush1.msra.mxu0 %v246
        %292 = vmatprep.subr.mxu0 %v249
        %293 = vmatpush1.msra.mxu0 %v248
        %294 = vmatprep.subr.mxu0 %v251
        %295 = vmatpush1.msra.mxu0 %v250
        %296 = vmatprep.subr.mxu0 %v253
        %297 = vmatpush1.msra.mxu0 %v252
        %298 = vmatprep.subr.mxu0 %v255
        %299 = vmatpush1.msra.mxu0 %v254
        %300 = vmatprep.subr.mxu0 %v257
        %301 = vmatpush1.msra.mxu0 %v256
        %302 = vmatprep.subr.mxu0 %v259
        %303 = vmatpush1.msra.mxu0 %v258
        %304 = vmatprep.subr.mxu0 %v261
        %305 = vmatpush1.msra.mxu0 %v260
        %306 = vmatprep.subr.mxu0 %v263
        %307 = vmatpush1.msra.mxu0 %v262
        %308 = vmatprep.subr.mxu0 0.0
        %309 = vmatpush1.msra.mxu0 0.0
        %310 = vmatprep.subr.mxu0 0.0
        %311 = vmatpush1.msra.mxu0 0.0
        %312 = vmatprep.subr.mxu0 0.0
        %313 = vmatpush1.msra.mxu0 0.0
        %314 = vmatprep.subr.mxu0 0.0
        %315 = vmatpush1.msra.mxu0 0.0
        %316 = vmatprep.subr.mxu0 0.0
        %317 = vmatpush1.msra.mxu0 0.0
        %318 = vmatprep.subr.mxu0 0.0
        %319 = vmatpush1.msra.mxu0 0.0
        %320 = vmatprep.subr.mxu0 0.0
        %321 = vmatpush1.msra.mxu0 0.0
        %322 = vmatprep.subr.mxu0 0.0
        %323 = vmatpush1.msra.mxu0 0.0
        %324 = vmatprep.subr.mxu0 0.0
        %325 = vmatpush1.msra.mxu0 0.0
        %326 = vmatprep.subr.mxu0 0.0
        %327 = vmatpush1.msra.mxu0 0.0
        %328 = vmatprep.subr.mxu0 0.0
        %329 = vmatpush1.msra.mxu0 0.0
        %330 = vmatprep.subr.mxu0 0.0
        %331 = vmatpush1.msra.mxu0 0.0
        %332 = vmatprep.subr.mxu0 0.0
        %333 = vmatpush1.msra.mxu0 0.0
        %334 = vmatprep.subr.mxu0 0.0
        %335 = vmatpush1.msra.mxu0 0.0
        %336 = vmatprep.subr.mxu0 0.0
        %337 = vmatpush1.msra.mxu0 0.0
        %338 = vmatprep.subr.mxu0 0.0
        %339 = vmatpush1.msra.mxu0 0.0
        %340 = vmatprep.mubr.f32.mxu0 0.0
        %341 = vmatmul.mubr.f32.gmra.mrb[0].mxu0 %v224
        %v342 = vpop.f32.mrb[0].mxu0
        %v343 = vadd.f32 %v269, %v342
        %v344 = vpop.f32.mrb[0].mxu0
        %v345 = vadd.f32 %v273, %v344
        %346 = vmatprep.mubr.f32.mxu0 0.0
        %347 = vmatmul.mubr.f32.gmra.mrb[0].mxu0 %v225
        %v348 = vpop.f32.mrb[0].mxu0
        %v349 = vadd.f32 %v269, %v348
        %v350 = vpop.f32.mrb[0].mxu0
        %v351 = vadd.f32 %v273, %v350
        %352 = vmatprep.mubr.f32.mxu0 0.0
        %353 = vmatmul.mubr.f32.gmra.mrb[0].mxu0 %v226
        %v354 = vpop.f32.mrb[0].mxu0
        %v355 = vadd.f32 %v269, %v354
        %v356 = vpop.f32.mrb[0].mxu0
        %v357 = vadd.f32 %v273, %v356
        %358 = vmatprep.mubr.f32.mxu0 0.0
        %359 = vmatmul.mubr.f32.gmra.mrb[0].mxu0 %v227
        %v360 = vpop.f32.mrb[0].mxu0
        %v361 = vadd.f32 %v269, %v360
        %v362 = vpop.f32.mrb[0].mxu0
        %v363 = vadd.f32 %v273, %v362
        %364 = vmatprep.mubr.f32.mxu0 0.0
        %365 = vmatmul.mubr.f32.gmra.mrb[0].mxu0 %v228
        %v366 = vpop.f32.mrb[0].mxu0
        %v367 = vadd.f32 %v269, %v366
        %v368 = vpop.f32.mrb[0].mxu0
        %v369 = vadd.f32 %v273, %v368
        %370 = vmatprep.mubr.f32.mxu0 0.0
        %371 = vmatmul.mubr.f32.gmra.mrb[0].mxu0 %v229
        %v372 = vpop.f32.mrb[0].mxu0
        %v373 = vadd.f32 %v269, %v372
        %v374 = vpop.f32.mrb[0].mxu0
        %v375 = vadd.f32 %v273, %v374
        %376 = vmatprep.mubr.f32.mxu0 0.0
        %377 = vmatmul.mubr.f32.gmra.mrb[0].mxu0 %v230
        %v378 = vpop.f32.mrb[0].mxu0
        %v379 = vadd.f32 %v269, %v378
        %v380 = vpop.f32.mrb[0].mxu0
        %v381 = vadd.f32 %v273, %v380
        %382 = vmatprep.mubr.f32.mxu0 0.0
        %383 = vmatmul.mubr.f32.gmra.mrb[0].mxu0 %v231
        %v384 = vpop.f32.mrb[0].mxu0
        %v385 = vadd.f32 %v269, %v384
        %v386 = vpop.f32.mrb[0].mxu0
        %v387 = vadd.f32 %v273, %v386
        %388 = vdwg.mxu0
        %389 = vst [vmem:[%s221] sm:$0xff] %v343
        %390 = vst [vmem:[%s221 + $0x8] sm:$0xff] %v345
        %391 = vst [vmem:[%s221 + $0x10] sm:$0xff] %v349
        %392 = vst [vmem:[%s221 + $0x18] sm:$0xff] %v351
        %393 = vst [vmem:[%s221 + $0x20] sm:$0xff] %v355
        %394 = vst [vmem:[%s221 + $0x28] sm:$0xff] %v357
        %395 = vst [vmem:[%s221 + $0x30] sm:$0xff] %v361
        %396 = vst [vmem:[%s221 + $0x38] sm:$0xff] %v363
        %397 = vst [vmem:[%s221 + $0x40] sm:$0xff] %v367
        %398 = vst [vmem:[%s221 + $0x48] sm:$0xff] %v369
        %399 = vst [vmem:[%s221 + $0x50] sm:$0xff] %v373
        %400 = vst [vmem:[%s221 + $0x58] sm:$0xff] %v375
        %401 = vst [vmem:[%s221 + $0x60] sm:$0xff] %v379
        %402 = vst [vmem:[%s221 + $0x68] sm:$0xff] %v381
        %403 = vst [vmem:[%s221 + $0x70] sm:$0xff] %v385
        %404 = vst [vmem:[%s221 + $0x78] sm:$0xff] %v387
        %s405 = sand.u32 %s113, 1
        %s406 = scalar_lea.sflag [#allocation4], %s405
        %s407 = sand.u32 %s113, 1
        %s408 = smul.addr %s407, 128
        %s409 = scalar_lea.vmem [#allocation7], %s408
        // Predicated region
        $region41: #{tpu_custom_call.1} parent=31 // pred_check
          %p410 = pneg %p123
        $region42: #{tpu_custom_call.1} parent=31 // pred_check_branch
          %412 = sbr.rel (%p410) target = $region44
        $region43: #{tpu_custom_call.1} parent=31 // pred_region
          %s413 = smul.u32 8, %s26
          %s415 = ssub.s32 2048, 2048
          %416 = vsyncadd %s406, %s415
          %s417 = smul.addr %s413, 2
          %s418 = smul.addr %s25, 64
          %s419 = sadd.s32 %s417, %s418
          %s420 = smul.addr %s419, 128
          %s421 = scalar_lea.hbm %s3, %s420
          %s422 = sshll.u32 %s409, 4
          %s423 = int_to_ptr.vmem [resolvable:$true] %s422
          %428 = dma.vmem_to_hbm [thread:$0]  %s423, 2048, %s421, %s406, 256, 256, 16
        $region44: #{tpu_custom_call.1} parent=31 // pred_fallthru
          _
      $region32: #{tpu_custom_call.1} parent=5 // pred_fallthru
        _
      %p429 = scmp.le.s32.totalorder 2, %s16
      // Predicated region
      $region45: #{tpu_custom_call.1} parent=5 // pred_check
        %p430 = pneg %p429
      $region46: #{tpu_custom_call.1} parent=5 // pred_check_branch
        %432 = sbr.rel (%p430) target = $region48
      $region47: #{tpu_custom_call.1} parent=5 // pred_region
        %s433 = ssub.s32 %s16, 2
        // Predicated region
        $region49: #{tpu_custom_call.1} parent=47 // pred_check
          %p434 = pneg %p129
        $region50: #{tpu_custom_call.1} parent=47 // pred_check_branch
          %436 = sbr.rel (%p434) target = $region52
        $region51: #{tpu_custom_call.1} parent=47 // pred_region
          %s437 = sand.u32 %s114, 1
          %s438 = scalar_lea.sflag [#allocation4], %s437
          %s439 = sand.u32 %s114, 1
          %s440 = smul.addr %s439, 128
          %s441 = scalar_lea.vmem [#allocation7], %s440
          %442 = dma.done %s438, 2048
        $region52: #{tpu_custom_call.1} parent=47 // pred_fallthru
          _
      $region48: #{tpu_custom_call.1} parent=5 // pred_fallthru
        _
    $region6: #{tpu_custom_call.1} parent=1 // loop_footer
      %s20 = sadd.s32 1, %s16
    $region7: #{tpu_custom_call.1} parent=1 // loop_footer_branch
      %15 = sbr.rel target = $region3
    $region8: #{tpu_custom_call.1} parent=1 // loop_exit
      _
    %443 = vsyncpa [#allocation3], 1
    %s444 = scalar_lea.sflag [#allocation3], 1
    %445 = vsyncpa %s444, 1
    %446 = vsyncpa [#allocation6], 1
    %447 = vsyncpa [#allocation4], 1
    %s448 = scalar_lea.sflag [#allocation4], 1
    %449 = vsyncpa %s448, 1

</llo_original>
